<compile_context>
chip_gen: v6e
topology: v6e:2x2x1
jax: 0.10.0
libtpu: 0.0.40
codegen_flags: <defaults>
</compile_context>

<pallas_src>
import functools

import jax
import jax.numpy as jnp
from jax import lax
from jax.experimental import pallas as pl
from jax.experimental.pallas import tpu as pltpu


def _cdiv(a, b):
    return (a + b - 1) // b


def _round_up(x, m):
    return ((x + m - 1) // m) * m


def _balanced_tile(dim, tile_max, align):
    """tile <= tile_max (multiple of `align`) minimizing total padding."""
    n = max(1, _cdiv(dim, tile_max))
    tile = _round_up(_cdiv(dim, n), align)
    return tile, n, n * tile          # tile, num_blocks, padded extent


def _adder_kernel(wT_ref, x_ref, o_ref, acc_ref, *, ck, sf):
    """One (tf, tl) output tile, accumulating over one (tk,) slice of K.

    wT_ref : (tk, tf)  slice of W_col^T  (k on sublanes, f on lanes)
    x_ref  : (tk, tl)  slice of X_col    (k on sublanes, l on lanes)
    o_ref  : (tf, tl)  output tile (written on the last K step only)
    acc_ref: (tf, tl)  float32 VMEM accumulator, persists across the K axis

    Register-blocked: for each sf-row output sub-tile, a (sf, tl) register
    accumulator is carried through the K loop and flushed to acc_ref once.
    """
    k_step = pl.program_id(2)
    tk = x_ref.shape[0]
    tf = o_ref.shape[0]
    tl = o_ref.shape[1]
    num_chunks = tk // ck

    @pl.when(k_step == 0)
    def _init():
        acc_ref[...] = jnp.zeros_like(acc_ref)

    for f0 in range(0, tf, sf):        # static loop over f sub-tiles

        def chunk_body(c, acc):
            k0 = pl.multiple_of(c * ck, ck)
            # (ck, sf) slice of W^T; one tiny (8,8) transpose so the per-k
            # weight column below is a cheap *static* lane slice.
            w_cols = wT_ref[pl.ds(k0, ck), f0:f0 + sf].T        # (sf, ck)
            x_rows = x_ref[pl.ds(k0, ck), :]                    # (ck, tl)
            # Accumulate |w[f,k] - x[k,l]| one k at a time: only (sf, tl)
            # sized values are ever live (a handful of vregs) -- no 3-D
            # intermediate, no XLU reduction, no VMEM round-trips.
            for kk in range(ck):
                acc = acc + jnp.abs(w_cols[:, kk:kk + 1] - x_rows[kk:kk + 1, :])
            return acc

        acc0 = jnp.zeros((sf, tl), jnp.float32)
        acc_f = lax.fori_loop(0, num_chunks, chunk_body, acc0)
        acc_ref[f0:f0 + sf, :] += acc_f   # one RMW per sub-tile per K step

    @pl.when(k_step == pl.num_programs(2) - 1)
    def _finalize():
        o_ref[...] = -acc_ref[...].astype(o_ref.dtype)


def adder_matmul(w_col, x_col, *, tf_max=128, tl_max=512, tk_max=512,
                 ck=8, sf=8):
    """out[f, l] = -sum_k |w_col[f, k] - x_col[k, l]|  via Pallas."""
    F, K = w_col.shape
    K2, L = x_col.shape
    assert K == K2

    # Tile sizes honoring the (8, 128) layout constraints:
    #   tf: lane dim of the wT block / sublane dim of out (multiple of 8)
    #   tl: lane dim of the x/out blocks (multiple of 128)
    #   tk: sublane dim of the wT/x blocks (multiple of ck=8)
    tf, nf, Fp = _balanced_tile(F, tf_max, 8)
    tl, nl, Lp = _balanced_tile(L, tl_max, 128)
    tk, nk, Kp = _balanced_tile(K, tk_max, ck)

    # Zero padding along K is exact (|0 - 0| = 0 contribution); padded F rows
    # and L columns are sliced away below.
    wT = jnp.pad(jnp.transpose(w_col).astype(jnp.float32),
                 ((0, Kp - K), (0, Fp - F)))
    x_p = jnp.pad(x_col.astype(jnp.float32), ((0, Kp - K), (0, Lp - L)))

    grid = (nf, nl, nk)

    cost = pl.CostEstimate(
        flops=3 * Fp * Kp * Lp,
        transcendentals=0,
        bytes_accessed=4 * (Kp * Lp * nf + Kp * Fp * nl + Fp * Lp),
    )

    out = pl.pallas_call(
        functools.partial(_adder_kernel, ck=ck, sf=sf),
        out_shape=jax.ShapeDtypeStruct((Fp, Lp), jnp.float32),
        grid_spec=pltpu.PrefetchScalarGridSpec(
            num_scalar_prefetch=0,
            grid=grid,
            in_specs=[
                pl.BlockSpec((tk, tf), lambda i, j, k: (k, i)),   # W_col^T
                pl.BlockSpec((tk, tl), lambda i, j, k: (k, j)),   # X_col
            ],
            out_specs=pl.BlockSpec((tf, tl), lambda i, j, k: (i, j)),
            scratch_shapes=[pltpu.VMEM((tf, tl), jnp.float32)],
        ),
        compiler_params=pltpu.CompilerParams(
            dimension_semantics=("parallel", "parallel", "arbitrary"),
        ),
        cost_estimate=cost,
    )(wT, x_p)
    return out[:F, :L]


def adder2d_forward(x, w, stride=1, padding=0):
    """x: (N, C, H, W) float32; w: (F, C, k, k) float32 -> (N, F, h_out, w_out)."""
    N, C, H, W = x.shape
    Fch, Cw, kh, kw = w.shape
    assert C == Cw and kh == kw
    h_out = (H - kh + 2 * padding) // stride + 1
    w_out = (W - kw + 2 * padding) // stride + 1

    # im2col (host-side glue) -- matches torch unfold ordering (c, kh, kw).
    xp = jnp.pad(x, ((0, 0), (0, 0), (padding, padding), (padding, padding)))
    rows = []
    for dh in range(kh):
        cols = []
        for dw in range(kw):
            slab = xp[:, :,
                      dh: dh + stride * (h_out - 1) + 1: stride,
                      dw: dw + stride * (w_out - 1) + 1: stride]  # (N,C,h_out,w_out)
            cols.append(slab)
        rows.append(jnp.stack(cols, axis=2))          # (N, C, kw, h_out, w_out)
    patches = jnp.stack(rows, axis=2)                 # (N, C, kh, kw, h_out, w_out)

    # (C, kh, kw, h_out, w_out, N) -> (K, L) with L = (i*w_out + j)*N + n
    x_col = jnp.transpose(patches, (1, 2, 3, 4, 5, 0)).reshape(
        C * kh * kw, h_out * w_out * N)
    w_col = w.reshape(Fch, C * kh * kw)

    out = adder_matmul(w_col, x_col)                  # (F, h_out*w_out*N)
    out = out.reshape(Fch, h_out, w_out, N)
    out = jnp.transpose(out, (3, 0, 1, 2))            # (N, F, h_out, w_out)
    return out


def adder2d_reference(x, w, stride=1, padding=0):
    """Pure-JAX reference for verification."""
    N, C, H, W = x.shape
    Fch, _, kh, kw = w.shape
    h_out = (H - kh + 2 * padding) // stride + 1
    w_out = (W - kw + 2 * padding) // stride + 1
    xp = jnp.pad(x, ((0, 0), (0, 0), (padding, padding), (padding, padding)))
    out = jnp.zeros((N, Fch, h_out, w_out), jnp.float32)
    for i in range(h_out):
        for j in range(w_out):
            patch = xp[:, :, i * stride:i * stride + kh, j * stride:j * stride + kw]
            d = jnp.abs(patch[:, None] - w[None, :]).sum(axis=(2, 3, 4))
            out = out.at[:, :, i, j].set(-d)
    return out


class Adder2d:
    """JAX/Pallas port of the PyTorch Adder2d module (forward pass)."""

    def __init__(self, input_channel, output_channel, kernel_size,
                 stride=1, padding=0, key=None):
        self.stride = stride
        self.padding = padding
        key = key if key is not None else jax.random.PRNGKey(0)
        # nn.init.normal_ -> standard normal, shape (F, C, k, k)
        self.weight = jax.random.normal(
            key, (output_channel, input_channel, kernel_size, kernel_size),
            dtype=jnp.float32)
        self._fwd = jax.jit(functools.partial(
            adder2d_forward, stride=stride, padding=padding))

    def __call__(self, x):
        return self._fwd(x, self.weight)


if __name__ == "__main__":
    key = jax.random.PRNGKey(0)
    kx, kw = jax.random.split(key)

    N, C, H, W = 2, 4, 16, 16
    F, ksz, stride, padding = 8, 3, 1, 1

    x = jax.random.normal(kx, (N, C, H, W), dtype=jnp.float32)
    mod = Adder2d(C, F, ksz, stride=stride, padding=padding, key=kw)

    out = jax.block_until_ready(mod(x))

    ref = adder2d_reference(x, mod.weight, stride=stride, padding=padding)
    assert out.shape == (N, F, H, W), out.shape
    assert jnp.allclose(out, ref, atol=1e-4, rtol=1e-4), "mismatch vs reference"

    print("KERNEL_OK")
</pallas_src>

<mosaic_0001>
module attributes {stable_mosaic.version = 11 : i64} {
  func.func @_adder_kernel(%arg0: i32, %arg1: i32, %arg2: i32, %arg3: memref<40x8xf32, #tpu.memory_space<vmem>>, %arg4: memref<40x512xf32, #tpu.memory_space<vmem>>, %arg5: memref<8x512xf32, #tpu.memory_space<vmem>>, %arg6: memref<8x512xf32, #tpu.memory_space<vmem>>) attributes {dimension_semantics = [#tpu.dimension_semantics<parallel>, #tpu.dimension_semantics<parallel>, #tpu.dimension_semantics<arbitrary>], iteration_bounds = array<i64: 1, 1, 1>, scalar_prefetch = 0 : i64, scratch_operands = 1 : i64, tpu.core_type = #tpu.core_type<tc>, window_params = [{transform_indices = @transform_0, window_bounds = array<i64: 40, 8>}, {transform_indices = @transform_1, window_bounds = array<i64: 40, 512>}, {transform_indices = @transform_2, window_bounds = array<i64: 8, 512>}]} {
    %c0_i32 = arith.constant 0 : i32
    %0 = arith.cmpi eq, %arg2, %c0_i32 : i32
    %1 = arith.extui %0 : i1 to i32
    %c0_i32_0 = arith.constant 0 : i32
    %2 = arith.cmpi ne, %1, %c0_i32_0 : i32
    scf.if %2 {
      %cst_8 = arith.constant 0.000000e+00 : f32
      %12 = vector.broadcast %cst_8 : f32 to vector<8x512xf32>
      %c0_9 = arith.constant 0 : index
      %c0_10 = arith.constant 0 : index
      %13 = vector.load %arg6[%c0_9, %c0_10] : memref<8x512xf32, #tpu.memory_space<vmem>>, vector<8x512xf32>
      tpu.vector_store %arg6[%c0_9, %c0_10], %12 {strides = array<i32>} : memref<8x512xf32, #tpu.memory_space<vmem>>, vector<8x512xf32>,
    } else {
    }
    %cst = arith.constant 0.000000e+00 : f32
    %3 = vector.broadcast %cst : f32 to vector<8x512xf32>
    %c0_i32_1 = arith.constant 0 : i32
    %c5_i32 = arith.constant 5 : i32
    %4 = arith.addi %c0_i32_1, %c5_i32 : i32
    %c1_i32 = arith.constant 1 : i32
    %5 = scf.for %arg7 = %c0_i32_1 to %4 step %c1_i32 iter_args(%arg8 = %3) -> (vector<8x512xf32>)  : i32 {
      %c8_i32 = arith.constant 8 : i32
      %12 = arith.muli %arg7, %c8_i32 : i32
      %13 = tpu.assume_multiple %12, 8 : i32
      %14 = arith.index_cast %13 : i32 to index
      %c0_8 = arith.constant 0 : index
      %15 = vector.load %arg3[%14, %c0_8] : memref<40x8xf32, #tpu.memory_space<vmem>>, vector<8x8xf32>
      %16 = tpu.transpose %15, [1, 0] : vector<8x8xf32> -> vector<8x8xf32>
      %17 = arith.index_cast %13 : i32 to index
      %c0_9 = arith.constant 0 : index
      %18 = vector.load %arg4[%17, %c0_9] : memref<40x512xf32, #tpu.memory_space<vmem>>, vector<8x512xf32>
      %19 = vector.extract_strided_slice %16 {offsets = [0, 0], sizes = [8, 1], strides = [1, 1]} : vector<8x8xf32> to vector<8x1xf32>
      %20 = vector.extract_strided_slice %18 {offsets = [0, 0], sizes = [1, 512], strides = [1, 1]} : vector<8x512xf32> to vector<1x512xf32>
      %21 = vector.broadcast %19 : vector<8x1xf32> to vector<8x512xf32>
      %22 = vector.broadcast %20 : vector<1x512xf32> to vector<8x512xf32>
      %23 = arith.subf %21, %22 : vector<8x512xf32>
      %24 = math.absf %23 : vector<8x512xf32>
      %25 = arith.addf %arg8, %24 : vector<8x512xf32>
      %26 = vector.extract_strided_slice %16 {offsets = [0, 1], sizes = [8, 1], strides = [1, 1]} : vector<8x8xf32> to vector<8x1xf32>
      %27 = vector.extract_strided_slice %18 {offsets = [1, 0], sizes = [1, 512], strides = [1, 1]} : vector<8x512xf32> to vector<1x512xf32>
      %28 = vector.broadcast %26 : vector<8x1xf32> to vector<8x512xf32>
      %29 = vector.broadcast %27 : vector<1x512xf32> to vector<8x512xf32>
      %30 = arith.subf %28, %29 : vector<8x512xf32>
      %31 = math.absf %30 : vector<8x512xf32>
      %32 = arith.addf %25, %31 : vector<8x512xf32>
      %33 = vector.extract_strided_slice %16 {offsets = [0, 2], sizes = [8, 1], strides = [1, 1]} : vector<8x8xf32> to vector<8x1xf32>
      %34 = vector.extract_strided_slice %18 {offsets = [2, 0], sizes = [1, 512], strides = [1, 1]} : vector<8x512xf32> to vector<1x512xf32>
      %35 = vector.broadcast %33 : vector<8x1xf32> to vector<8x512xf32>
      %36 = vector.broadcast %34 : vector<1x512xf32> to vector<8x512xf32>
      %37 = arith.subf %35, %36 : vector<8x512xf32>
      %38 = math.absf %37 : vector<8x512xf32>
      %39 = arith.addf %32, %38 : vector<8x512xf32>
      %40 = vector.extract_strided_slice %16 {offsets = [0, 3], sizes = [8, 1], strides = [1, 1]} : vector<8x8xf32> to vector<8x1xf32>
      %41 = vector.extract_strided_slice %18 {offsets = [3, 0], sizes = [1, 512], strides = [1, 1]} : vector<8x512xf32> to vector<1x512xf32>
      %42 = vector.broadcast %40 : vector<8x1xf32> to vector<8x512xf32>
      %43 = vector.broadcast %41 : vector<1x512xf32> to vector<8x512xf32>
      %44 = arith.subf %42, %43 : vector<8x512xf32>
      %45 = math.absf %44 : vector<8x512xf32>
      %46 = arith.addf %39, %45 : vector<8x512xf32>
      %47 = vector.extract_strided_slice %16 {offsets = [0, 4], sizes = [8, 1], strides = [1, 1]} : vector<8x8xf32> to vector<8x1xf32>
      %48 = vector.extract_strided_slice %18 {offsets = [4, 0], sizes = [1, 512], strides = [1, 1]} : vector<8x512xf32> to vector<1x512xf32>
      %49 = vector.broadcast %47 : vector<8x1xf32> to vector<8x512xf32>
      %50 = vector.broadcast %48 : vector<1x512xf32> to vector<8x512xf32>
      %51 = arith.subf %49, %50 : vector<8x512xf32>
      %52 = math.absf %51 : vector<8x512xf32>
      %53 = arith.addf %46, %52 : vector<8x512xf32>
      %54 = vector.extract_strided_slice %16 {offsets = [0, 5], sizes = [8, 1], strides = [1, 1]} : vector<8x8xf32> to vector<8x1xf32>
      %55 = vector.extract_strided_slice %18 {offsets = [5, 0], sizes = [1, 512], strides = [1, 1]} : vector<8x512xf32> to vector<1x512xf32>
      %56 = vector.broadcast %54 : vector<8x1xf32> to vector<8x512xf32>
      %57 = vector.broadcast %55 : vector<1x512xf32> to vector<8x512xf32>
      %58 = arith.subf %56, %57 : vector<8x512xf32>
      %59 = math.absf %58 : vector<8x512xf32>
      %60 = arith.addf %53, %59 : vector<8x512xf32>
      %61 = vector.extract_strided_slice %16 {offsets = [0, 6], sizes = [8, 1], strides = [1, 1]} : vector<8x8xf32> to vector<8x1xf32>
      %62 = vector.extract_strided_slice %18 {offsets = [6, 0], sizes = [1, 512], strides = [1, 1]} : vector<8x512xf32> to vector<1x512xf32>
      %63 = vector.broadcast %61 : vector<8x1xf32> to vector<8x512xf32>
      %64 = vector.broadcast %62 : vector<1x512xf32> to vector<8x512xf32>
      %65 = arith.subf %63, %64 : vector<8x512xf32>
      %66 = math.absf %65 : vector<8x512xf32>
      %67 = arith.addf %60, %66 : vector<8x512xf32>
      %68 = vector.extract_strided_slice %16 {offsets = [0, 7], sizes = [8, 1], strides = [1, 1]} : vector<8x8xf32> to vector<8x1xf32>
      %69 = vector.extract_strided_slice %18 {offsets = [7, 0], sizes = [1, 512], strides = [1, 1]} : vector<8x512xf32> to vector<1x512xf32>
      %70 = vector.broadcast %68 : vector<8x1xf32> to vector<8x512xf32>
      %71 = vector.broadcast %69 : vector<1x512xf32> to vector<8x512xf32>
      %72 = arith.subf %70, %71 : vector<8x512xf32>
      %73 = math.absf %72 : vector<8x512xf32>
      %74 = arith.addf %67, %73 : vector<8x512xf32>
      scf.yield %74 : vector<8x512xf32>
    }
    %c5_i32_2 = arith.constant 5 : i32
    %c0 = arith.constant 0 : index
    %c0_3 = arith.constant 0 : index
    %6 = vector.load %arg6[%c0, %c0_3] : memref<8x512xf32, #tpu.memory_space<vmem>>, vector<8x512xf32>
    %7 = arith.addf %6, %5 : vector<8x512xf32>
    %c0_4 = arith.constant 0 : index
    %c0_5 = arith.constant 0 : index
    %8 = vector.load %arg6[%c0_4, %c0_5] : memref<8x512xf32, #tpu.memory_space<vmem>>, vector<8x512xf32>
    tpu.vector_store %arg6[%c0_4, %c0_5], %7 {strides = array<i32>} : memref<8x512xf32, #tpu.memory_space<vmem>>, vector<8x512xf32>,
    %c0_i32_6 = arith.constant 0 : i32
    %9 = arith.cmpi eq, %arg2, %c0_i32_6 : i32
    %10 = arith.extui %9 : i1 to i32
    %c0_i32_7 = arith.constant 0 : i32
    %11 = arith.cmpi ne, %10, %c0_i32_7 : i32
    scf.if %11 {
      %c0_8 = arith.constant 0 : index
      %c0_9 = arith.constant 0 : index
      %12 = vector.load %arg6[%c0_8, %c0_9] : memref<8x512xf32, #tpu.memory_space<vmem>>, vector<8x512xf32>
      %cst_10 = arith.constant 0.000000e+00 : f32
      %13 = vector.broadcast %cst_10 : f32 to vector<8x512xf32>
      %14 = arith.subf %13, %12 : vector<8x512xf32>
      %c0_11 = arith.constant 0 : index
      %c0_12 = arith.constant 0 : index
      %15 = vector.load %arg5[%c0_11, %c0_12] : memref<8x512xf32, #tpu.memory_space<vmem>>, vector<8x512xf32>
      tpu.vector_store %arg5[%c0_11, %c0_12], %14 {strides = array<i32>} : memref<8x512xf32, #tpu.memory_space<vmem>>, vector<8x512xf32>,
    } else {
    }
    return
  }
  func.func @transform_0(%arg0: i32, %arg1: i32, %arg2: i32) -> (i32, i32) {
    %c0_i32 = arith.constant 0 : i32
    return %arg2, %arg0 : i32, i32
  }
  func.func @transform_1(%arg0: i32, %arg1: i32, %arg2: i32) -> (i32, i32) {
    %c0_i32 = arith.constant 0 : i32
    return %arg2, %arg1 : i32, i32
  }
  func.func @transform_2(%arg0: i32, %arg1: i32, %arg2: i32) -> (i32, i32) {
    %c0_i32 = arith.constant 0 : i32
    return %arg0, %arg1 : i32, i32
  }
}

</mosaic_0001>

<llo_original>
// kernel: adder2d_forward.1
$region0: #{adder2d_forward.1}
  #allocation0 [shape = 'u32[]', space=smem, size = 0x4, offset = 0x4, fixed_abs, tag = 'smem constant byte address 0x4 - core index']
  #allocation1 [shape = 'u32[144,128]{1,0:T(1,128)}', space=vmem, size = 0x12000, scoped, tag = 'internal scratch']
  #allocation2 [shape = 'f32[8,512]{1,0:T(8,128)}', space=vmem, size = 0x4000, scoped, tag = 'scratch operand']
  %s0 = inlined_call_operand.vmem [shape: f32[40,8], index: 0, kind: input, shape index: {}]
  %s1 = inlined_call_operand.vmem [shape: f32[40,512], index: 1, kind: input, shape index: {}]
  %s2 = inlined_call_operand.vmem [shape: f32[8,512], index: 2, kind: output, shape index: {}]
  %s3 = sld [smem:[#allocation0]]
  $region33: #{adder2d_forward.1} parent=0
    _
  %s5 = ssub.s32 1, %s3
  %s6 = scalar_select 0, %s5, %s3
  // Predicated region
  $region2: #{adder2d_forward.1} parent=0 // pred_check
    _
  $region3: #{adder2d_forward.1} parent=0 // pred_check_branch
    %8 = sbr.rel (0) target = $region5
  $region4: #{adder2d_forward.1} parent=0 // pred_region
    _
  $region5: #{adder2d_forward.1} parent=0 // pred_fallthru
    _
  // Predicated region
  $region6: #{adder2d_forward.1} parent=0 // pred_check
    _
  $region7: #{adder2d_forward.1} parent=0 // pred_check_branch
    %10 = sbr.rel (0) target = $region9
  $region8: #{adder2d_forward.1} parent=0 // pred_region
    _
  $region9: #{adder2d_forward.1} parent=0 // pred_fallthru
    _
  %p11 = scmp.eq.s32.totalorder 0, 0
  // Predicated region
  $region10: #{adder2d_forward.1} parent=0 // pred_check
    %p12 = pneg %p11
  $region11: #{adder2d_forward.1} parent=0 // pred_check_branch
    %14 = sbr.rel (%p12) target = $region13
  $region12: #{adder2d_forward.1} parent=0 // pred_region
    %15 = vst [vmem:[#allocation2] sm:$0xff] 0.0
    %16 = vst [vmem:[#allocation2 + $0x8] sm:$0xff] 0.0
    %17 = vst [vmem:[#allocation2 + $0x10] sm:$0xff] 0.0
    %18 = vst [vmem:[#allocation2 + $0x18] sm:$0xff] 0.0
  $region13: #{adder2d_forward.1} parent=0 // pred_fallthru
    _
  loop: start=0, step=1, limit=5
  $region14: #{adder2d_forward.1} parent=0 // loop_pre_header
    _
  $region15: #{adder2d_forward.1} parent=0 // loop_header
    %s20 = sphi 0, %s24
    %p21 = scmp.ge.s32.totalorder %s20, 5
    %v25 = vphi 0.0, %v326
    %v26 = vphi 0.0, %v327
    %v27 = vphi 0.0, %v328
    %v28 = vphi 0.0, %v329
  $region16: #{adder2d_forward.1} parent=0 // loop_header_branch
    %23 = sbr.rel (%p21) target = $region20
  $region17: #{adder2d_forward.1} parent=0 // loop_body
    %s29 = smul.u32 %s20, 8
    %s30 = scalar_lea.vmem %s0, %s29
    %v31 = vld [vmem:[%s30] sm:$0xff]
    %32 = vxpose.xlu0.b32.start [1/16] %v31, 128
    %33 = vxpose.xlu0.b32.cont [2/16] 0.0, 128
    %34 = vxpose.xlu0.b32.cont [3/16] 0.0, 128
    %35 = vxpose.xlu0.b32.cont [4/16] 0.0, 128
    %36 = vxpose.xlu0.b32.cont [5/16] 0.0, 128
    %37 = vxpose.xlu0.b32.cont [6/16] 0.0, 128
    %38 = vxpose.xlu0.b32.cont [7/16] 0.0, 128
    %39 = vxpose.xlu0.b32.cont [8/16] 0.0, 128
    %40 = vxpose.xlu0.b32.cont [9/16] 0.0, 128
    %41 = vxpose.xlu0.b32.cont [10/16] 0.0, 128
    %42 = vxpose.xlu0.b32.cont [11/16] 0.0, 128
    %43 = vxpose.xlu0.b32.cont [12/16] 0.0, 128
    %44 = vxpose.xlu0.b32.cont [13/16] 0.0, 128
    %45 = vxpose.xlu0.b32.cont [14/16] 0.0, 128
    %46 = vxpose.xlu0.b32.cont [15/16] 0.0, 128
    %47 = vxpose.xlu0.b32.end [16/16] 0.0, 128
    %v48 = vpop.trf.xlu0
    %v49 = vpop.trf.xlu0
    %v50 = vpop.trf.xlu0
    %v51 = vpop.trf.xlu0
    %v52 = vpop.trf.xlu0
    %v53 = vpop.trf.xlu0
    %v54 = vpop.trf.xlu0
    %v55 = vpop.trf.xlu0
    %v56 = vpop.trf.xlu0
    %v57 = vpop.trf.xlu0
    %v58 = vpop.trf.xlu0
    %v59 = vpop.trf.xlu0
    %v60 = vpop.trf.xlu0
    %v61 = vpop.trf.xlu0
    %v62 = vpop.trf.xlu0
    %v63 = vpop.trf.xlu0
    %s64 = sshra.s32 %s29, 3
    %s65 = sand.u32 %s29, 7
    %s66 = smul.u32 %s64, 4
    %s67 = smul.addr %s66, 8
    %s68 = scalar_lea.vmem %s1, %s67
    %v69 = vld [vmem:[%s68] sm:$0xff]
    %v70 = vld [vmem:[%s68 + $0x8] sm:$0xff]
    %v71 = vld [vmem:[%s68 + $0x10] sm:$0xff]
    %v72 = vld [vmem:[%s68 + $0x18] sm:$0xff]
    %74 = vset.pattern.permute.xlu0 0
    %75 = vperm.xlu0 %74, %v48
    %v76 = vpop.permute.xlu0 %75
    %v78 = vlaneseq
    %v79 = vshrl.u32 %v78, 7
    %v80 = vsub.s32 0, %v79
    %v81 = vrot.slane %v69, %v80
    %v82 = vlaneseq
    %v83 = vshrl.u32 %v82, 7
    %v84 = vsub.s32 0, %v83
    %v85 = vrot.slane %v70, %v84
    %v86 = vlaneseq
    %v87 = vshrl.u32 %v86, 7
    %v88 = vsub.s32 0, %v87
    %v89 = vrot.slane %v71, %v88
    %v90 = vlaneseq
    %v91 = vshrl.u32 %v90, 7
    %v92 = vsub.s32 0, %v91
    %v93 = vrot.slane %v72, %v92
    %v94 = vsub.f32 %v76, %v81
    %v95 = vsub.f32 %v76, %v85
    %v96 = vsub.f32 %v76, %v89
    %v97 = vsub.f32 %v76, %v93
    %v98 = vand.u32 2147483647, %v94
    %v99 = vand.u32 2147483647, %v95
    %v100 = vand.u32 2147483647, %v96
    %v101 = vand.u32 2147483647, %v97
    %v102 = vadd.f32 %v25, %v98
    %v103 = vadd.f32 %v26, %v99
    %v104 = vadd.f32 %v27, %v100
    %v105 = vadd.f32 %v28, %v101
    %106 = vset.pattern.permute.xlu0 1
    %107 = vperm.xlu0 %106, %v48
    %v108 = vpop.permute.xlu0 %107
    %v110 = vlaneseq
    %v111 = vshrl.u32 %v110, 7
    %v112 = vsub.s32 1, %v111
    %v113 = vrot.slane %v69, %v112
    %v114 = vlaneseq
    %v115 = vshrl.u32 %v114, 7
    %v116 = vsub.s32 1, %v115
    %v117 = vrot.slane %v70, %v116
    %v118 = vlaneseq
    %v119 = vshrl.u32 %v118, 7
    %v120 = vsub.s32 1, %v119
    %v121 = vrot.slane %v71, %v120
    %v122 = vlaneseq
    %v123 = vshrl.u32 %v122, 7
    %v124 = vsub.s32 1, %v123
    %v125 = vrot.slane %v72, %v124
    %v126 = vsub.f32 %v108, %v113
    %v127 = vsub.f32 %v108, %v117
    %v128 = vsub.f32 %v108, %v121
    %v129 = vsub.f32 %v108, %v125
    %v130 = vand.u32 2147483647, %v126
    %v131 = vand.u32 2147483647, %v127
    %v132 = vand.u32 2147483647, %v128
    %v133 = vand.u32 2147483647, %v129
    %v134 = vadd.f32 %v102, %v130
    %v135 = vadd.f32 %v103, %v131
    %v136 = vadd.f32 %v104, %v132
    %v137 = vadd.f32 %v105, %v133
    %138 = vset.pattern.permute.xlu0 2
    %139 = vperm.xlu0 %138, %v48
    %v140 = vpop.permute.xlu0 %139
    %v142 = vlaneseq
    %v143 = vshrl.u32 %v142, 7
    %v144 = vsub.s32 2, %v143
    %v145 = vrot.slane %v69, %v144
    %v146 = vlaneseq
    %v147 = vshrl.u32 %v146, 7
    %v148 = vsub.s32 2, %v147
    %v149 = vrot.slane %v70, %v148
    %v150 = vlaneseq
    %v151 = vshrl.u32 %v150, 7
    %v152 = vsub.s32 2, %v151
    %v153 = vrot.slane %v71, %v152
    %v154 = vlaneseq
    %v155 = vshrl.u32 %v154, 7
    %v156 = vsub.s32 2, %v155
    %v157 = vrot.slane %v72, %v156
    %v158 = vsub.f32 %v140, %v145
    %v159 = vsub.f32 %v140, %v149
    %v160 = vsub.f32 %v140, %v153
    %v161 = vsub.f32 %v140, %v157
    %v162 = vand.u32 2147483647, %v158
    %v163 = vand.u32 2147483647, %v159
    %v164 = vand.u32 2147483647, %v160
    %v165 = vand.u32 2147483647, %v161
    %v166 = vadd.f32 %v134, %v162
    %v167 = vadd.f32 %v135, %v163
    %v168 = vadd.f32 %v136, %v164
    %v169 = vadd.f32 %v137, %v165
    %170 = vset.pattern.permute.xlu0 3
    %171 = vperm.xlu0 %170, %v48
    %v172 = vpop.permute.xlu0 %171
    %v174 = vlaneseq
    %v175 = vshrl.u32 %v174, 7
    %v176 = vsub.s32 3, %v175
    %v177 = vrot.slane %v69, %v176
    %v178 = vlaneseq
    %v179 = vshrl.u32 %v178, 7
    %v180 = vsub.s32 3, %v179
    %v181 = vrot.slane %v70, %v180
    %v182 = vlaneseq
    %v183 = vshrl.u32 %v182, 7
    %v184 = vsub.s32 3, %v183
    %v185 = vrot.slane %v71, %v184
    %v186 = vlaneseq
    %v187 = vshrl.u32 %v186, 7
    %v188 = vsub.s32 3, %v187
    %v189 = vrot.slane %v72, %v188
    %v190 = vsub.f32 %v172, %v177
    %v191 = vsub.f32 %v172, %v181
    %v192 = vsub.f32 %v172, %v185
    %v193 = vsub.f32 %v172, %v189
    %v194 = vand.u32 2147483647, %v190
    %v195 = vand.u32 2147483647, %v191
    %v196 = vand.u32 2147483647, %v192
    %v197 = vand.u32 2147483647, %v193
    %v198 = vadd.f32 %v166, %v194
    %v199 = vadd.f32 %v167, %v195
    %v200 = vadd.f32 %v168, %v196
    %v201 = vadd.f32 %v169, %v197
    %202 = vset.pattern.permute.xlu0 4
    %203 = vperm.xlu0 %202, %v48
    %v204 = vpop.permute.xlu0 %203
    %v206 = vlaneseq
    %v207 = vshrl.u32 %v206, 7
    %v208 = vsub.s32 4, %v207
    %v209 = vrot.slane %v69, %v208
    %v210 = vlaneseq
    %v211 = vshrl.u32 %v210, 7
    %v212 = vsub.s32 4, %v211
    %v213 = vrot.slane %v70, %v212
    %v214 = vlaneseq
    %v215 = vshrl.u32 %v214, 7
    %v216 = vsub.s32 4, %v215
    %v217 = vrot.slane %v71, %v216
    %v218 = vlaneseq
    %v219 = vshrl.u32 %v218, 7
    %v220 = vsub.s32 4, %v219
    %v221 = vrot.slane %v72, %v220
    %v222 = vsub.f32 %v204, %v209
    %v223 = vsub.f32 %v204, %v213
    %v224 = vsub.f32 %v204, %v217
    %v225 = vsub.f32 %v204, %v221
    %v226 = vand.u32 2147483647, %v222
    %v227 = vand.u32 2147483647, %v223
    %v228 = vand.u32 2147483647, %v224
    %v229 = vand.u32 2147483647, %v225
    %v230 = vadd.f32 %v198, %v226
    %v231 = vadd.f32 %v199, %v227
    %v232 = vadd.f32 %v200, %v228
    %v233 = vadd.f32 %v201, %v229
    %234 = vset.pattern.permute.xlu0 5
    %235 = vperm.xlu0 %234, %v48
    %v236 = vpop.permute.xlu0 %235
    %v238 = vlaneseq
    %v239 = vshrl.u32 %v238, 7
    %v240 = vsub.s32 5, %v239
    %v241 = vrot.slane %v69, %v240
    %v242 = vlaneseq
    %v243 = vshrl.u32 %v242, 7
    %v244 = vsub.s32 5, %v243
    %v245 = vrot.slane %v70, %v244
    %v246 = vlaneseq
    %v247 = vshrl.u32 %v246, 7
    %v248 = vsub.s32 5, %v247
    %v249 = vrot.slane %v71, %v248
    %v250 = vlaneseq
    %v251 = vshrl.u32 %v250, 7
    %v252 = vsub.s32 5, %v251
    %v253 = vrot.slane %v72, %v252
    %v254 = vsub.f32 %v236, %v241
    %v255 = vsub.f32 %v236, %v245
    %v256 = vsub.f32 %v236, %v249
    %v257 = vsub.f32 %v236, %v253
    %v258 = vand.u32 2147483647, %v254
    %v259 = vand.u32 2147483647, %v255
    %v260 = vand.u32 2147483647, %v256
    %v261 = vand.u32 2147483647, %v257
    %v262 = vadd.f32 %v230, %v258
    %v263 = vadd.f32 %v231, %v259
    %v264 = vadd.f32 %v232, %v260
    %v265 = vadd.f32 %v233, %v261
    %266 = vset.pattern.permute.xlu0 6
    %267 = vperm.xlu0 %266, %v48
    %v268 = vpop.permute.xlu0 %267
    %v270 = vlaneseq
    %v271 = vshrl.u32 %v270, 7
    %v272 = vsub.s32 6, %v271
    %v273 = vrot.slane %v69, %v272
    %v274 = vlaneseq
    %v275 = vshrl.u32 %v274, 7
    %v276 = vsub.s32 6, %v275
    %v277 = vrot.slane %v70, %v276
    %v278 = vlaneseq
    %v279 = vshrl.u32 %v278, 7
    %v280 = vsub.s32 6, %v279
    %v281 = vrot.slane %v71, %v280
    %v282 = vlaneseq
    %v283 = vshrl.u32 %v282, 7
    %v284 = vsub.s32 6, %v283
    %v285 = vrot.slane %v72, %v284
    %v286 = vsub.f32 %v268, %v273
    %v287 = vsub.f32 %v268, %v277
    %v288 = vsub.f32 %v268, %v281
    %v289 = vsub.f32 %v268, %v285
    %v290 = vand.u32 2147483647, %v286
    %v291 = vand.u32 2147483647, %v287
    %v292 = vand.u32 2147483647, %v288
    %v293 = vand.u32 2147483647, %v289
    %v294 = vadd.f32 %v262, %v290
    %v295 = vadd.f32 %v263, %v291
    %v296 = vadd.f32 %v264, %v292
    %v297 = vadd.f32 %v265, %v293
    %298 = vset.pattern.permute.xlu0 7
    %299 = vperm.xlu0 %298, %v48
    %v300 = vpop.permute.xlu0 %299
    %v302 = vlaneseq
    %v303 = vshrl.u32 %v302, 7
    %v304 = vsub.s32 7, %v303
    %v305 = vrot.slane %v69, %v304
    %v306 = vlaneseq
    %v307 = vshrl.u32 %v306, 7
    %v308 = vsub.s32 7, %v307
    %v309 = vrot.slane %v70, %v308
    %v310 = vlaneseq
    %v311 = vshrl.u32 %v310, 7
    %v312 = vsub.s32 7, %v311
    %v313 = vrot.slane %v71, %v312
    %v314 = vlaneseq
    %v315 = vshrl.u32 %v314, 7
    %v316 = vsub.s32 7, %v315
    %v317 = vrot.slane %v72, %v316
    %v318 = vsub.f32 %v300, %v305
    %v319 = vsub.f32 %v300, %v309
    %v320 = vsub.f32 %v300, %v313
    %v321 = vsub.f32 %v300, %v317
    %v322 = vand.u32 2147483647, %v318
    %v323 = vand.u32 2147483647, %v319
    %v324 = vand.u32 2147483647, %v320
    %v325 = vand.u32 2147483647, %v321
    %v326 = vadd.f32 %v294, %v322
    %v327 = vadd.f32 %v295, %v323
    %v328 = vadd.f32 %v296, %v324
    %v329 = vadd.f32 %v297, %v325
  $region18: #{adder2d_forward.1} parent=0 // loop_footer
    %s24 = sadd.s32 1, %s20
  $region19: #{adder2d_forward.1} parent=0 // loop_footer_branch
    %19 = sbr.rel target = $region15
  $region20: #{adder2d_forward.1} parent=0 // loop_exit
    _
  %v330 = vld [vmem:[#allocation2] sm:$0xff]
  %v331 = vld [vmem:[#allocation2 + $0x8] sm:$0xff]
  %v332 = vld [vmem:[#allocation2 + $0x10] sm:$0xff]
  %v333 = vld [vmem:[#allocation2 + $0x18] sm:$0xff]
  %v334 = vadd.f32 %v330, %v25
  %v335 = vadd.f32 %v331, %v26
  %v336 = vadd.f32 %v332, %v27
  %v337 = vadd.f32 %v333, %v28
  %338 = vst [vmem:[#allocation2] sm:$0xff] %v334
  %339 = vst [vmem:[#allocation2 + $0x8] sm:$0xff] %v335
  %340 = vst [vmem:[#allocation2 + $0x10] sm:$0xff] %v336
  %341 = vst [vmem:[#allocation2 + $0x18] sm:$0xff] %v337
  // Predicated region
  $region21: #{adder2d_forward.1} parent=0 // pred_check
    %p342 = pneg %p11
  $region22: #{adder2d_forward.1} parent=0 // pred_check_branch
    %344 = sbr.rel (%p342) target = $region24
  $region23: #{adder2d_forward.1} parent=0 // pred_region
    %v345 = vld [vmem:[#allocation2] sm:$0xff]
    %v346 = vld [vmem:[#allocation2 + $0x8] sm:$0xff]
    %v347 = vld [vmem:[#allocation2 + $0x10] sm:$0xff]
    %v348 = vld [vmem:[#allocation2 + $0x18] sm:$0xff]
    %v349 = vsub.f32 0.0, %v345
    %v350 = vsub.f32 0.0, %v346
    %v351 = vsub.f32 0.0, %v347
    %v352 = vsub.f32 0.0, %v348
    %353 = vst [vmem:[%s2] sm:$0xff] %v349
    %354 = vst [vmem:[%s2 + $0x8] sm:$0xff] %v350
    %355 = vst [vmem:[%s2 + $0x10] sm:$0xff] %v351
    %356 = vst [vmem:[%s2 + $0x18] sm:$0xff] %v352
  $region24: #{adder2d_forward.1} parent=0 // pred_fallthru
    _
  // Predicated region
  $region25: #{adder2d_forward.1} parent=0 // pred_check
    _
  $region26: #{adder2d_forward.1} parent=0 // pred_check_branch
    %358 = sbr.rel (0) target = $region28
  $region27: #{adder2d_forward.1} parent=0 // pred_region
    _
  $region28: #{adder2d_forward.1} parent=0 // pred_fallthru
    _
  // Predicated region
  $region29: #{adder2d_forward.1} parent=0 // pred_check
    _
  $region30: #{adder2d_forward.1} parent=0 // pred_check_branch
    %360 = sbr.rel (0) target = $region32
  $region31: #{adder2d_forward.1} parent=0 // pred_region
    _
  $region32: #{adder2d_forward.1} parent=0 // pred_fallthru
    _

</llo_original>
